<compile_context>
chip_gen: v6e
topology: v6e:2x2x1
jax: 0.10.0
libtpu: 0.0.40
codegen_flags: <defaults>
</compile_context>

<pallas_src>
import functools

import jax
import jax.numpy as jnp
import numpy as np
from jax import lax
from jax.experimental import pallas as pl
from jax.experimental.pallas import tpu as pltpu


# ----------------------------------------------------------------------------
# One-time parameter packing (outside the forward path)
# ----------------------------------------------------------------------------
def _phase_taps(K, s, p):
    """1-D transposed conv: out[s*q + ph] = sum_k x[q + e] * W[k]
    with e = (ph + p - k)/s for k s.t. (ph + p - k) % s == 0."""
    taps = []
    for ph in range(s):
        lst = []
        for k in range(K):
            if (ph + p - k) % s == 0:
                lst.append((k, (ph + p - k) // s))
        taps.append(lst)
    return taps


def pack_deconv_params(w_t, b, alpha, *, kernel_size, stride, padding):
    """Precompute the phase-decomposed, MXU-friendly weight/bias layout.

    w_t: PyTorch ConvTranspose2d weight, shape (C_in, C_out, K, K).
    b:   bias, shape (C_out,).
    alpha: scalar PReLU slope (nn.PReLU() default: num_parameters=1).
    """
    K, s, p = kernel_size, stride, padding
    # TODO(synk): only the "output = stride*H" geometry (K == s + 2*p) is supported,
    # which covers DeconvBlock defaults (4,2,1) and the usual SR configs (6,2,2), (8,4,2).
    assert K == s + 2 * p, "pack_deconv_params requires kernel_size == stride + 2*padding"

    w_t = np.asarray(w_t, np.float32)
    C_in, C_out = w_t.shape[0], w_t.shape[1]
    taps = _phase_taps(K, s, p)

    # distinct 2-D input offsets used by any phase
    offs = sorted({(ey, ex) for ty in taps for tx in taps
                   for (_, ey) in ty for (_, ex) in tx})
    off_index = {o: i for i, o in enumerate(offs)}
    n_off = len(offs)
    M = s * s * C_out

    # packed weight: rows = (phase_y, phase_x, c_out), cols = (offset, c_in)
    w_pack = np.zeros((M, n_off * C_in), np.float32)
    for py in range(s):
        for px in range(s):
            row0 = (py * s + px) * C_out
            for (ky, ey) in taps[py]:
                for (kx, ex) in taps[px]:
                    col0 = off_index[(ey, ex)] * C_in
                    # out[(py,px), co, q] += W[ci, co, ky, kx] * x[ci, q + (ey,ex)]
                    w_pack[row0:row0 + C_out, col0:col0 + C_in] = w_t[:, :, ky, kx].T

    b_pack = np.tile(np.asarray(b, np.float32), s * s).reshape(M, 1)

    eys = [ey for (ey, _) in offs]
    exs = [ex for (_, ex) in offs]
    pads = dict(top=max(0, -min(eys)), bottom=max(0, max(eys)) + 1,  # +1 row: flat-slice safety
                left=max(0, -min(exs)), right=max(0, max(exs)))

    return dict(
        w_pack=jnp.asarray(w_pack, jnp.bfloat16),        # bf16 MXU operand
        b_pack=jnp.asarray(b_pack, jnp.float32),
        alpha=jnp.asarray(alpha, jnp.float32).reshape(1, 1),
        offsets=tuple(offs), pads=pads,
        C_in=C_in, C_out=C_out, K=K, stride=s, padding=p, n_off=n_off)


# ----------------------------------------------------------------------------
# Pallas kernel: whole DeconvBlock forward for one image
# ----------------------------------------------------------------------------
def _deconv_act_kernel(x_ref, w_ref, b_ref, a_ref, o_ref, *,
                       flat_offsets, L, activation):
    # x_ref: (C_in, Lp)  f32   padded, row-flattened image (channels-first)
    # w_ref: (M, n_off*C_in) bf16   phase-packed transposed-conv weight
    # b_ref: (M, 1) f32,  a_ref: (1, 1) f32,  o_ref: (M, L) f32
    # Contiguous flat slices (no strided-patch reshapes), concatenated along sublanes.
    cols = [x_ref[:, d:d + L] for d in flat_offsets]            # each (C_in, L)
    X = jnp.concatenate(cols, axis=0).astype(jnp.bfloat16)      # (n_off*C_in, L)

    # one lane-dense MXU matmul per image, f32 accumulation
    acc = jnp.dot(w_ref[...], X, preferred_element_type=jnp.float32)  # (M, L)
    acc = acc + b_ref[...]

    if activation == 'prelu':
        acc = jnp.where(acc >= 0.0, acc, a_ref[...] * acc)
    elif activation == 'relu':
        acc = jnp.maximum(acc, 0.0)
    elif activation == 'lrelu':
        acc = jnp.where(acc >= 0.0, acc, 0.2 * acc)
    elif activation == 'tanh':
        acc = jnp.tanh(acc)
    elif activation == 'sigmoid':
        acc = jax.nn.sigmoid(acc)
    # activation is None -> linear

    o_ref[...] = acc.astype(o_ref.dtype)


# ----------------------------------------------------------------------------
# Forward wrapper (jit this; only cheap layout glue outside the kernel)
# ----------------------------------------------------------------------------
def deconv_block_forward(x, packed, *, activation='prelu'):
    """x: (N, C_in, H, W) NCHW (PyTorch layout). Returns (N, C_out, s*H, s*W)."""
    N, C_in, H, W = x.shape
    s, C_out, n_off = packed['stride'], packed['C_out'], packed['n_off']
    pads = packed['pads']
    Hp = H + pads['top'] + pads['bottom']
    Wp = W + pads['left'] + pads['right']
    Lp = Hp * Wp
    L = H * Wp                       # per-phase flat output length (Wp-W garbage cols/row)
    M = s * s * C_out
    flat_offsets = tuple((pads['top'] + ey) * Wp + (pads['left'] + ex)
                         for (ey, ex) in packed['offsets'])

    xp = jnp.pad(x.astype(jnp.float32),
                 ((0, 0), (0, 0),
                  (pads['top'], pads['bottom']),
                  (pads['left'], pads['right'])))
    xflat = xp.reshape(N, C_in, Lp)

    kernel = functools.partial(_deconv_act_kernel, flat_offsets=flat_offsets,
                               L=L, activation=activation)

    out = pl.pallas_call(
        kernel,
        out_shape=jax.ShapeDtypeStruct((N, M, L), jnp.float32),
        grid_spec=pltpu.PrefetchScalarGridSpec(
            num_scalar_prefetch=0,
            grid=(N,),
            in_specs=[
                pl.BlockSpec((pl.Squeezed(), C_in, Lp), lambda n: (n, 0, 0)),
                pl.BlockSpec((M, n_off * C_in), lambda n: (0, 0)),
                pl.BlockSpec((M, 1), lambda n: (0, 0)),
                pl.BlockSpec((1, 1), lambda n: (0, 0)),
            ],
            out_specs=pl.BlockSpec((pl.Squeezed(), M, L), lambda n: (n, 0, 0)),
        ),
        compiler_params=pltpu.CompilerParams(
            dimension_semantics=("parallel",)),   # batch across TCs on v7x
    )(xflat, packed['w_pack'], packed['b_pack'], packed['alpha'])

    # strip garbage columns + depth-to-space interleave of the s*s phases
    y = out.reshape(N, s, s, C_out, H, Wp)[..., :W]          # (N, py, px, co, qy, qx)
    y = y.transpose(0, 3, 4, 1, 5, 2).reshape(N, C_out, s * H, s * W)
    return y


# ----------------------------------------------------------------------------
# Pure-JAX reference (ground-truth DeconvBlock semantics)
# ----------------------------------------------------------------------------
def _ref_deconv_block(x, w_t, b, alpha, *, stride, padding, activation='prelu'):
    K = w_t.shape[2]
    w_conv = jnp.transpose(w_t, (2, 3, 0, 1))[::-1, ::-1, :, :]   # HWIO, flipped
    out = lax.conv_general_dilated(
        x, w_conv, (1, 1), [(K - 1 - padding, K - 1 - padding)] * 2,
        lhs_dilation=(stride, stride),
        dimension_numbers=('NCHW', 'HWIO', 'NCHW'),
        precision=lax.Precision.HIGHEST)
    out = out + b[None, :, None, None]
    if activation == 'prelu':
        out = jnp.where(out >= 0, out, alpha * out)
    return out


# ----------------------------------------------------------------------------
# main
# ----------------------------------------------------------------------------
if __name__ == "__main__":
    input_size, output_size = 8, 4          # DeconvBlock(input_size, output_size)
    K, s, p = 4, 2, 1                       # module defaults
    N, H, W = 2, 16, 16

    key = jax.random.PRNGKey(0)
    k_w, k_b, k_x = jax.random.split(key, 3)
    fan = input_size * K * K
    w_t = jax.random.normal(k_w, (input_size, output_size, K, K), jnp.float32) / np.sqrt(fan)
    b = jax.random.normal(k_b, (output_size,), jnp.float32) / np.sqrt(fan)
    alpha = jnp.float32(0.25)               # nn.PReLU() default (single shared slope)
    x = jax.random.normal(k_x, (N, input_size, H, W), jnp.float32)

    packed = pack_deconv_params(w_t, b, alpha, kernel_size=K, stride=s, padding=p)
    fwd = jax.jit(functools.partial(deconv_block_forward, packed=packed,
                                    activation='prelu'))

    out = jax.block_until_ready(fwd(x))
    assert out.shape == (N, output_size, s * H, s * W), out.shape

    # 1) structural check: reference fed the same bf16-rounded operands (tight tol)
    x_bf = x.astype(jnp.bfloat16).astype(jnp.float32)
    w_bf = w_t.astype(jnp.bfloat16).astype(jnp.float32)
    ref_bf = jax.block_until_ready(
        _ref_deconv_block(x_bf, w_bf, b, alpha, stride=s, padding=p))
    np.testing.assert_allclose(np.asarray(out), np.asarray(ref_bf),
                               atol=1e-3, rtol=1e-3)

    # 2) end-to-end check vs full-f32 module semantics (loose tol: bf16 MXU operands)
    ref = jax.block_until_ready(
        _ref_deconv_block(x, w_t, b, alpha, stride=s, padding=p))
    np.testing.assert_allclose(np.asarray(out), np.asarray(ref),
                               atol=3e-2, rtol=3e-2)

    print("KERNEL_OK")
</pallas_src>

<mosaic_0001>
module attributes {stable_mosaic.version = 11 : i64} {
  func.func @_deconv_act_kernel(%arg0: i32, %arg1: memref<1x8x342xf32, #tpu.memory_space<vmem>>, %arg2: memref<16x72xbf16, #tpu.memory_space<vmem>>, %arg3: memref<16x1xf32, #tpu.memory_space<vmem>>, %arg4: memref<1x1xf32, #tpu.memory_space<vmem>>, %arg5: memref<1x16x288xf32, #tpu.memory_space<vmem>>) attributes {dimension_semantics = [#tpu.dimension_semantics<parallel>], iteration_bounds = array<i64: 2>, scalar_prefetch = 0 : i64, scratch_operands = 0 : i64, tpu.core_type = #tpu.core_type<tc>, window_params = [{transform_indices = @transform_0, window_bounds = array<i64: 1, 8, 342>}, {pipeline_mode = #tpu.pipeline_mode<synchronous>, transform_indices = @transform_1, window_bounds = array<i64: 16, 72>}, {pipeline_mode = #tpu.pipeline_mode<synchronous>, transform_indices = @transform_2, window_bounds = array<i64: 16, 1>}, {pipeline_mode = #tpu.pipeline_mode<synchronous>, transform_indices = @transform_3, window_bounds = array<i64: 1, 1>}, {transform_indices = @transform_4, window_bounds = array<i64: 1, 16, 288>}]} {
    %c0 = arith.constant 0 : index
    %c0_0 = arith.constant 0 : index
    %c0_1 = arith.constant 0 : index
    %0 = vector.load %arg1[%c0, %c0_0, %c0_1] : memref<1x8x342xf32, #tpu.memory_space<vmem>>, vector<1x8x288xf32>
    %1 = vector.shape_cast %0 : vector<1x8x288xf32> to vector<8x288xf32>
    %c0_2 = arith.constant 0 : index
    %c0_3 = arith.constant 0 : index
    %c1 = arith.constant 1 : index
    %2 = vector.load %arg1[%c0_2, %c0_3, %c1] : memref<1x8x342xf32, #tpu.memory_space<vmem>>, vector<1x8x288xf32>
    %3 = vector.shape_cast %2 : vector<1x8x288xf32> to vector<8x288xf32>
    %c0_4 = arith.constant 0 : index
    %c0_5 = arith.constant 0 : index
    %c2 = arith.constant 2 : index
    %4 = vector.load %arg1[%c0_4, %c0_5, %c2] : memref<1x8x342xf32, #tpu.memory_space<vmem>>, vector<1x8x288xf32>
    %5 = vector.shape_cast %4 : vector<1x8x288xf32> to vector<8x288xf32>
    %c0_6 = arith.constant 0 : index
    %c0_7 = arith.constant 0 : index
    %c18 = arith.constant 18 : index
    %6 = vector.load %arg1[%c0_6, %c0_7, %c18] : memref<1x8x342xf32, #tpu.memory_space<vmem>>, vector<1x8x288xf32>
    %7 = vector.shape_cast %6 : vector<1x8x288xf32> to vector<8x288xf32>
    %c0_8 = arith.constant 0 : index
    %c0_9 = arith.constant 0 : index
    %c19 = arith.constant 19 : index
    %8 = vector.load %arg1[%c0_8, %c0_9, %c19] : memref<1x8x342xf32, #tpu.memory_space<vmem>>, vector<1x8x288xf32>
    %9 = vector.shape_cast %8 : vector<1x8x288xf32> to vector<8x288xf32>
    %c0_10 = arith.constant 0 : index
    %c0_11 = arith.constant 0 : index
    %c20 = arith.constant 20 : index
    %10 = vector.load %arg1[%c0_10, %c0_11, %c20] : memref<1x8x342xf32, #tpu.memory_space<vmem>>, vector<1x8x288xf32>
    %11 = vector.shape_cast %10 : vector<1x8x288xf32> to vector<8x288xf32>
    %c0_12 = arith.constant 0 : index
    %c0_13 = arith.constant 0 : index
    %c36 = arith.constant 36 : index
    %12 = vector.load %arg1[%c0_12, %c0_13, %c36] : memref<1x8x342xf32, #tpu.memory_space<vmem>>, vector<1x8x288xf32>
    %13 = vector.shape_cast %12 : vector<1x8x288xf32> to vector<8x288xf32>
    %c0_14 = arith.constant 0 : index
    %c0_15 = arith.constant 0 : index
    %c37 = arith.constant 37 : index
    %14 = vector.load %arg1[%c0_14, %c0_15, %c37] : memref<1x8x342xf32, #tpu.memory_space<vmem>>, vector<1x8x288xf32>
    %15 = vector.shape_cast %14 : vector<1x8x288xf32> to vector<8x288xf32>
    %c0_16 = arith.constant 0 : index
    %c0_17 = arith.constant 0 : index
    %c38 = arith.constant 38 : index
    %16 = vector.load %arg1[%c0_16, %c0_17, %c38] : memref<1x8x342xf32, #tpu.memory_space<vmem>>, vector<1x8x288xf32>
    %17 = vector.shape_cast %16 : vector<1x8x288xf32> to vector<8x288xf32>
    %18 = tpu.concatenate %1, %3, %5, %7, %9, %11, %13, %15, %17 in 0 : vector<8x288xf32>, vector<8x288xf32>, vector<8x288xf32>, vector<8x288xf32>, vector<8x288xf32>, vector<8x288xf32>, vector<8x288xf32>, vector<8x288xf32>, vector<8x288xf32> -> vector<72x288xf32>
    %19 = arith.truncf %18 : vector<72x288xf32> to vector<72x288xbf16>
    %c0_18 = arith.constant 0 : index
    %c0_19 = arith.constant 0 : index
    %20 = vector.load %arg2[%c0_18, %c0_19] : memref<16x72xbf16, #tpu.memory_space<vmem>>, vector<16x72xbf16>
    %cst = arith.constant dense<0.000000e+00> : vector<16x288xf32>
    %21 = tpu.matmul %20, %19, %cst {dimension_numbers = #tpu.dot_dimension_numbers<[1], [0], [0], [1], [0, 0, 1, 1], [], []>} : vector<16x72xbf16>, vector<72x288xbf16>, vector<16x288xf32> -> vector<16x288xf32>
    %c0_20 = arith.constant 0 : index
    %c0_21 = arith.constant 0 : index
    %22 = vector.load %arg3[%c0_20, %c0_21] : memref<16x1xf32, #tpu.memory_space<vmem>>, vector<16x1xf32>
    %23 = vector.broadcast %22 : vector<16x1xf32> to vector<16x288xf32>
    %24 = arith.addf %21, %23 : vector<16x288xf32>
    %cst_22 = arith.constant 0.000000e+00 : f32
    %25 = vector.broadcast %cst_22 : f32 to vector<16x288xf32>
    %26 = arith.cmpf oge, %24, %25 : vector<16x288xf32>
    %c0_23 = arith.constant 0 : index
    %c0_24 = arith.constant 0 : index
    %27 = vector.load %arg4[%c0_23, %c0_24] : memref<1x1xf32, #tpu.memory_space<vmem>>, vector<1x1xf32>
    %28 = vector.broadcast %27 : vector<1x1xf32> to vector<16x288xf32>
    %29 = arith.mulf %28, %24 : vector<16x288xf32>
    %30 = arith.select %26, %24, %29 : vector<16x288xi1>, vector<16x288xf32>
    %c0_25 = arith.constant 0 : index
    %c0_26 = arith.constant 0 : index
    %c0_27 = arith.constant 0 : index
    %31 = vector.load %arg5[%c0_25, %c0_26, %c0_27] : memref<1x16x288xf32, #tpu.memory_space<vmem>>, vector<1x16x288xf32>
    %32 = vector.shape_cast %31 : vector<1x16x288xf32> to vector<16x288xf32>
    %33 = vector.shape_cast %30 : vector<16x288xf32> to vector<1x16x288xf32>
    tpu.vector_store %arg5[%c0_25, %c0_26, %c0_27], %33 {strides = array<i32>} : memref<1x16x288xf32, #tpu.memory_space<vmem>>, vector<1x16x288xf32>,
    return
  }
  func.func @transform_0(%arg0: i32) -> (i32, i32, i32) {
    %c0_i32 = arith.constant 0 : i32
    %c0_i32_0 = arith.constant 0 : i32
    %c0_i32_1 = arith.constant 0 : i32
    return %arg0, %c0_i32, %c0_i32_0 : i32, i32, i32
  }
  func.func @transform_1(%arg0: i32) -> (i32, i32) {
    %c0_i32 = arith.constant 0 : i32
    %c0_i32_0 = arith.constant 0 : i32
    %c0_i32_1 = arith.constant 0 : i32
    return %c0_i32, %c0_i32_0 : i32, i32
  }
  func.func @transform_2(%arg0: i32) -> (i32, i32) {
    %c0_i32 = arith.constant 0 : i32
    %c0_i32_0 = arith.constant 0 : i32
    %c0_i32_1 = arith.constant 0 : i32
    return %c0_i32, %c0_i32_0 : i32, i32
  }
  func.func @transform_3(%arg0: i32) -> (i32, i32) {
    %c0_i32 = arith.constant 0 : i32
    %c0_i32_0 = arith.constant 0 : i32
    %c0_i32_1 = arith.constant 0 : i32
    return %c0_i32, %c0_i32_0 : i32, i32
  }
  func.func @transform_4(%arg0: i32) -> (i32, i32, i32) {
    %c0_i32 = arith.constant 0 : i32
    %c0_i32_0 = arith.constant 0 : i32
    %c0_i32_1 = arith.constant 0 : i32
    return %arg0, %c0_i32, %c0_i32_0 : i32, i32, i32
  }
}

</mosaic_0001>

<llo_original>
// kernel: deconv_block_forward.1
$region0: #{deconv_block_forward.1}
  #allocation0 [shape = 'u32[]', space=smem, size = 0x4, offset = 0x4, fixed_abs, tag = 'smem constant byte address 0x4 - core index']
  #allocation1 [shape = 'u32[144,128]{1,0:T(1,128)}', space=vmem, size = 0x12000, scoped, tag = 'internal scratch']
  #allocation2 [shape = 'f32[1,1]{1,0:T(1,128)S(1)}', space=vmem, size = 0x200, scoped, tag = 'scoped memory for deconv_block_forward.1']
  %s0 = inlined_call_operand.vmem [shape: f32[2,8,342], index: 0, kind: input, shape index: {}]
  %s1 = inlined_call_operand.vmem [shape: bf16[16,72], index: 1, kind: input, shape index: {}]
  %s2 = inlined_call_operand.vmem [shape: f32[16,1], index: 2, kind: input, shape index: {}]
  %s3 = inlined_call_operand.<no memory space> [shape: f32[1,1], index: 3, kind: input, shape index: {}]
  %s4 = inlined_call_operand.vmem [shape: f32[2,16,288], index: 4, kind: output, shape index: {}]
  %s5 = sld [smem:[#allocation0]]
  $region49: #{deconv_block_forward.1} parent=0
    _
  %s7 = ssub.s32 1, %s5
  %s8 = scalar_select 0, %s7, %s5
  %v9 = vstv %s3
  %10 = vst [vmem:[#allocation2] sm:$0x1] %v9
  loop: start=0, step=1, limit=4
  $region2: #{deconv_block_forward.1} parent=0 // loop_pre_header
    _
  $region3: #{deconv_block_forward.1} parent=0 // loop_header
    %s12 = sphi 0, %s16
    %p13 = scmp.ge.s32.totalorder %s12, 4
    %s22 = sphi 0, %s24
    %s25 = sphi 0, %s22
    %s26 = sphi 0, %s25
    %s42 = sphi 0, %s26
    %s46 = sphi 0, %s46
    %s48 = sphi 0, %s46
    %s49 = sphi 0, %s48
    %s63 = sphi 0, %s49
    %s67 = sphi 0, %s67
    %s69 = sphi 0, %s67
    %s70 = sphi 0, %s69
    %s84 = sphi 0, %s70
    %s88 = sphi 0, %s88
    %s90 = sphi 0, %s88
    %s91 = sphi 0, %s90
    %s105 = sphi 0, %s91
    %s111 = sphi 0, %s113
    %s114 = sphi 0, %s111
    %s115 = sphi 0, %s114
    %s131 = sphi 0, %s115
  $region4: #{deconv_block_forward.1} parent=0 // loop_header_branch
    %15 = sbr.rel (%p13) target = $region8
  $region5: #{deconv_block_forward.1} parent=0 // loop_body
    %s17 = ssub.s32 %s12, 1
    %s18 = ssub.s32 %s12, 2
    %s19 = sadd.s32 %s12, 1
    %s20 = ssub.s32 %s12, %s19
    %p21 = scmp.eq.s32.totalorder %s20, 0
    %s23 = sadd.s32 %s22, 1
    %s24 = scalar_select %p21, %s22, %s23
    %p27 = pneg %p21
    %p28 = scmp.eq.s32.totalorder %s12, 1
    %p29 = por %p27, %p28
    %p30 = scmp.ne.s32.totalorder %s22, %s25
    %p31 = scmp.eq.s32.totalorder %s12, 0
    %p32 = por %p30, %p31
    %p33 = scmp.ne.s32.totalorder %s22, %s25
    %p34 = scmp.eq.s32.totalorder %s17, 1
    %p35 = por %p33, %p34
    %p36 = scmp.ne.s32.totalorder %s25, %s26
    %p37 = scmp.eq.s32.totalorder %s17, 0
    %p38 = por %p36, %p37
    %p39 = scmp.ne.s32.totalorder %s25, %s26
    %p40 = scmp.eq.s32.totalorder %s18, 1
    %p41 = por %p39, %p40
    %p43 = scmp.ne.s32.totalorder %s26, %s42
    %p44 = scmp.eq.s32.totalorder %s18, 0
    %p45 = por %p43, %p44
    %s47 = sadd.s32 %s46, 1
    %p50 = scmp.eq.s32.totalorder %s12, 1
    %p51 = scmp.ne.s32.totalorder %s46, %s48
    %p52 = scmp.eq.s32.totalorder %s12, 0
    %p53 = por %p51, %p52
    %p54 = scmp.ne.s32.totalorder %s46, %s48
    %p55 = scmp.eq.s32.totalorder %s17, 1
    %p56 = por %p54, %p55
    %p57 = scmp.ne.s32.totalorder %s48, %s49
    %p58 = scmp.eq.s32.totalorder %s17, 0
    %p59 = por %p57, %p58
    %p60 = scmp.ne.s32.totalorder %s48, %s49
    %p61 = scmp.eq.s32.totalorder %s18, 1
    %p62 = por %p60, %p61
    %p64 = scmp.ne.s32.totalorder %s49, %s63
    %p65 = scmp.eq.s32.totalorder %s18, 0
    %p66 = por %p64, %p65
    %s68 = sadd.s32 %s67, 1
    %p71 = scmp.eq.s32.totalorder %s12, 1
    %p72 = scmp.ne.s32.totalorder %s67, %s69
    %p73 = scmp.eq.s32.totalorder %s12, 0
    %p74 = por %p72, %p73
    %p75 = scmp.ne.s32.totalorder %s67, %s69
    %p76 = scmp.eq.s32.totalorder %s17, 1
    %p77 = por %p75, %p76
    %p78 = scmp.ne.s32.totalorder %s69, %s70
    %p79 = scmp.eq.s32.totalorder %s17, 0
    %p80 = por %p78, %p79
    %p81 = scmp.ne.s32.totalorder %s69, %s70
    %p82 = scmp.eq.s32.totalorder %s18, 1
    %p83 = por %p81, %p82
    %p85 = scmp.ne.s32.totalorder %s70, %s84
    %p86 = scmp.eq.s32.totalorder %s18, 0
    %p87 = por %p85, %p86
    %s89 = sadd.s32 %s88, 1
    %p92 = scmp.eq.s32.totalorder %s12, 1
    %p93 = scmp.ne.s32.totalorder %s88, %s90
    %p94 = scmp.eq.s32.totalorder %s12, 0
    %p95 = por %p93, %p94
    %p96 = scmp.ne.s32.totalorder %s88, %s90
    %p97 = scmp.eq.s32.totalorder %s17, 1
    %p98 = por %p96, %p97
    %p99 = scmp.ne.s32.totalorder %s90, %s91
    %p100 = scmp.eq.s32.totalorder %s17, 0
    %p101 = por %p99, %p100
    %p102 = scmp.ne.s32.totalorder %s90, %s91
    %p103 = scmp.eq.s32.totalorder %s18, 1
    %p104 = por %p102, %p103
    %p106 = scmp.ne.s32.totalorder %s91, %s105
    %p107 = scmp.eq.s32.totalorder %s18, 0
    %p108 = por %p106, %p107
    %s109 = ssub.s32 %s12, %s19
    %p110 = scmp.eq.s32.totalorder %s109, 0
    %s112 = sadd.s32 %s111, 1
    %s113 = scalar_select %p110, %s111, %s112
    %p116 = pneg %p110
    %p117 = scmp.eq.s32.totalorder %s12, 1
    %p118 = por %p116, %p117
    %p119 = scmp.ne.s32.totalorder %s111, %s114
    %p120 = scmp.eq.s32.totalorder %s12, 0
    %p121 = por %p119, %p120
    %p122 = scmp.ne.s32.totalorder %s111, %s114
    %p123 = scmp.eq.s32.totalorder %s17, 1
    %p124 = por %p122, %p123
    %p125 = scmp.ne.s32.totalorder %s114, %s115
    %p126 = scmp.eq.s32.totalorder %s17, 0
    %p127 = por %p125, %p126
    %p128 = scmp.ne.s32.totalorder %s114, %s115
    %p129 = scmp.eq.s32.totalorder %s18, 1
    %p130 = por %p128, %p129
    %p132 = scmp.ne.s32.totalorder %s115, %s131
    %p133 = scmp.eq.s32.totalorder %s18, 0
    %p134 = por %p132, %p133
    %p135 = scmp.le.s32.totalorder 1, %s12
    %p136 = scmp.lt.s32.totalorder %s12, 3
    %p137 = pnand %p135, %p136
    %p138 = pneg %p137
    // Predicated region
    $region9: #{deconv_block_forward.1} parent=5 // pred_check
      _
    $region10: #{deconv_block_forward.1} parent=5 // pred_check_branch
      %140 = sbr.rel (%p137) target = $region12
    $region11: #{deconv_block_forward.1} parent=5 // pred_region
      %s141 = ssub.s32 %s12, 1
      // Predicated region
      $region13: #{deconv_block_forward.1} parent=11 // pred_check
        %p142 = pneg %p59
      $region14: #{deconv_block_forward.1} parent=11 // pred_check_branch
        %144 = sbr.rel (%p142) target = $region16
      $region15: #{deconv_block_forward.1} parent=11 // pred_region
        _
      $region16: #{deconv_block_forward.1} parent=11 // pred_fallthru
        _
      // Predicated region
      $region17: #{deconv_block_forward.1} parent=11 // pred_check
        %p145 = pneg %p80
      $region18: #{deconv_block_forward.1} parent=11 // pred_check_branch
        %147 = sbr.rel (%p145) target = $region20
      $region19: #{deconv_block_forward.1} parent=11 // pred_region
        _
      $region20: #{deconv_block_forward.1} parent=11 // pred_fallthru
        _
      // Predicated region
      $region21: #{deconv_block_forward.1} parent=11 // pred_check
        %p148 = pneg %p101
      $region22: #{deconv_block_forward.1} parent=11 // pred_check_branch
        %150 = sbr.rel (%p148) target = $region24
      $region23: #{deconv_block_forward.1} parent=11 // pred_region
        _
      $region24: #{deconv_block_forward.1} parent=11 // pred_fallthru
        _
    $region12: #{deconv_block_forward.1} parent=5 // pred_fallthru
      _
    %p151 = scmp.lt.s32.totalorder %s12, 2
    // Predicated region
    $region25: #{deconv_block_forward.1} parent=5 // pred_check
      %p152 = pneg %p151
    $region26: #{deconv_block_forward.1} parent=5 // pred_check_branch
      %154 = sbr.rel (%p152) target = $region28
    $region27: #{deconv_block_forward.1} parent=5 // pred_region
      // Predicated region
      $region29: #{deconv_block_forward.1} parent=27 // pred_check
        %p155 = pneg %p32
      $region30: #{deconv_block_forward.1} parent=27 // pred_check_branch
        %157 = sbr.rel (%p155) target = $region32
      $region31: #{deconv_block_forward.1} parent=27 // pred_region
        %p158 = scmp.lt.s32.totalorder %s12, 1
        %s159 = scalar_select %p158, %s12, 1
        %s160 = smul.addr %s159, 3
        %s161 = smul.addr %s160, 8
        %s162 = scalar_lea.vmem %s0, %s161
      $region32: #{deconv_block_forward.1} parent=27 // pred_fallthru
        _
    $region28: #{deconv_block_forward.1} parent=5 // pred_fallthru
      _
    %p163 = scmp.le.s32.totalorder 1, %s12
    %p164 = scmp.lt.s32.totalorder %s12, 3
    %p165 = pnand %p163, %p164
    %p166 = pneg %p165
    // Predicated region
    $region33: #{deconv_block_forward.1} parent=5 // pred_check
      _
    $region34: #{deconv_block_forward.1} parent=5 // pred_check_branch
      %168 = sbr.rel (%p165) target = $region36
    $region35: #{deconv_block_forward.1} parent=5 // pred_region
      %s169 = ssub.s32 %s12, 1
      %p170 = scmp.lt.s32.totalorder %s17, 1
      %s171 = scalar_select %p170, %s17, 1
      %s172 = smul.addr %s171, 3
      %s173 = smul.addr %s172, 8
      %s174 = scalar_lea.vmem %s0, %s173
      %p175 = pneg %p38
      %p176 = pneg %p35
      %p177 = pneg %p59
      %p178 = pneg %p56
      %p179 = pneg %p80
      %p180 = pneg %p77
      %p181 = pneg %p101
      %p182 = pneg %p98
      %p183 = pneg %p127
      %p184 = pneg %p124
      %p185 = scmp.lt.s32.totalorder %s17, 1
      %s186 = scalar_select %p185, %s17, 1
      %s187 = smul.addr %s186, 6
      %s188 = smul.addr %s187, 8
      %s189 = scalar_lea.vmem %s4, %s188
      %p190 = scmp.lt.s32.totalorder %s17, 1
      %s191 = scalar_select %p190, %s17, 1
      %s192 = smul.addr %s191, 3
      %s193 = smul.addr %s192, 8
      %s194 = scalar_lea.vmem %s0, %s193
      %p195 = scmp.lt.s32.totalorder %s17, 1
      %s196 = scalar_select %p195, %s17, 1
      %s197 = smul.addr %s196, 6
      %s198 = smul.addr %s197, 8
      %s199 = scalar_lea.vmem %s4, %s198
      %v201 = vld [vmem:[%s194] sm:$0xff]
      %v202 = vld [vmem:[%s194 + $0x8] sm:$0xff]
      %v203 = vld [vmem:[%s194 + $0x10] sm:$0xff]
      %207 = vrot.lane.b32.xlu0 %v201, 127
      %v208 = vpop.permute.xlu0 %207
      %209 = vrot.lane.b32.xlu0 %v202, 127
      %v210 = vpop.permute.xlu0 %209
      %211 = vrot.lane.b32.xlu0 %v203, 127
      %v212 = vpop.permute.xlu0 %211
      %vm213 = vcmask 1039360
      %v214 = vsel %vm213, %v208, %v210
      %v215 = vsel %vm213, %v210, %v212
      %219 = vrot.lane.b32.xlu0 %v201, 126
      %v220 = vpop.permute.xlu0 %219
      %221 = vrot.lane.b32.xlu0 %v202, 126
      %v222 = vpop.permute.xlu0 %221
      %223 = vrot.lane.b32.xlu0 %v203, 126
      %v224 = vpop.permute.xlu0 %223
      %vm225 = vcmask 1031168
      %v226 = vsel %vm225, %v220, %v222
      %v227 = vsel %vm225, %v222, %v224
      %231 = vrot.lane.b32.xlu0 %v201, 110
      %v232 = vpop.permute.xlu0 %231
      %233 = vrot.lane.b32.xlu0 %v202, 110
      %v234 = vpop.permute.xlu0 %233
      %235 = vrot.lane.b32.xlu0 %v203, 110
      %v236 = vpop.permute.xlu0 %235
      %vm237 = vcmask 900096
      %v238 = vsel %vm237, %v232, %v234
      %v239 = vsel %vm237, %v234, %v236
      %243 = vrot.lane.b32.xlu0 %v201, 109
      %v244 = vpop.permute.xlu0 %243
      %245 = vrot.lane.b32.xlu0 %v202, 109
      %v246 = vpop.permute.xlu0 %245
      %247 = vrot.lane.b32.xlu0 %v203, 109
      %v248 = vpop.permute.xlu0 %247
      %vm249 = vcmask 891904
      %v250 = vsel %vm249, %v244, %v246
      %v251 = vsel %vm249, %v246, %v248
      %255 = vrot.lane.b32.xlu0 %v201, 108
      %v256 = vpop.permute.xlu0 %255
      %257 = vrot.lane.b32.xlu0 %v202, 108
      %v258 = vpop.permute.xlu0 %257
      %259 = vrot.lane.b32.xlu0 %v203, 108
      %v260 = vpop.permute.xlu0 %259
      %vm261 = vcmask 883712
      %v262 = vsel %vm261, %v256, %v258
      %v263 = vsel %vm261, %v258, %v260
      %267 = vrot.lane.b32.xlu0 %v201, 92
      %v268 = vpop.permute.xlu0 %267
      %269 = vrot.lane.b32.xlu0 %v202, 92
      %v270 = vpop.permute.xlu0 %269
      %271 = vrot.lane.b32.xlu0 %v203, 92
      %v272 = vpop.permute.xlu0 %271
      %vm273 = vcmask 752640
      %v274 = vsel %vm273, %v268, %v270
      %v275 = vsel %vm273, %v270, %v272
      %279 = vrot.lane.b32.xlu0 %v201, 91
      %v280 = vpop.permute.xlu0 %279
      %281 = vrot.lane.b32.xlu0 %v202, 91
      %v282 = vpop.permute.xlu0 %281
      %283 = vrot.lane.b32.xlu0 %v203, 91
      %v284 = vpop.permute.xlu0 %283
      %vm285 = vcmask 744448
      %v286 = vsel %vm285, %v280, %v282
      %v287 = vsel %vm285, %v282, %v284
      %291 = vrot.lane.b32.xlu0 %v201, 90
      %v292 = vpop.permute.xlu0 %291
      %293 = vrot.lane.b32.xlu0 %v202, 90
      %v294 = vpop.permute.xlu0 %293
      %295 = vrot.lane.b32.xlu0 %v203, 90
      %v296 = vpop.permute.xlu0 %295
      %vm297 = vcmask 736256
      %v298 = vsel %vm297, %v292, %v294
      %v299 = vsel %vm297, %v294, %v296
      %v303 = vpack.c.bf16 %v214, %v201
      %v304 = vpack.c.bf16 %v215, %v202
      %v305 = vpack.c.bf16 %v212, %v203
      %v306 = vpack.c.bf16 %v238, %v226
      %v307 = vpack.c.bf16 %v239, %v227
      %v308 = vpack.c.bf16 %v236, %v224
      %v309 = vpack.c.bf16 %v262, %v250
      %v310 = vpack.c.bf16 %v263, %v251
      %v311 = vpack.c.bf16 %v260, %v248
      %v312 = vpack.c.bf16 %v286, %v274
      %v313 = vpack.c.bf16 %v287, %v275
      %v314 = vpack.c.bf16 %v284, %v272
      %v315 = vpack.c.bf16 %v298, %v298
      %v316 = vpack.c.bf16 %v299, %v299
      %v317 = vpack.c.bf16 %v296, %v296
      %v318 = vld [vmem:[%s1] sm:$0xf]
      %v319 = vld [vmem:[%s1 + $0x4] sm:$0xf]
      %v320 = vld [vmem:[%s2] sm:$0xff]
      %v321 = vld [vmem:[%s2 + $0x8] sm:$0xff]
      %323 = vset.pattern.permute.xlu0 0
      %324 = vperm.xlu0 %323, %v320
      %v325 = vpop.permute.xlu0 %324
      %328 = vset.pattern.permute.xlu0 0
      %329 = vperm.xlu0 %328, %v321
      %v330 = vpop.permute.xlu0 %329
      %v334 = vunpack.c.l.b16 %v318
      %v335 = vunpack.c.l.b16 %v319
      %v336 = vpack.c.b16 %v335, %v334
      %vm337 = vcmask 588800
      %v339 = vsel %vm337, %v336, 0
      %vm341 = vcmask 1043456
      %v343 = vsel %vm341, %v315, 0
      %v346 = vsel %vm341, %v316, 0
      %v349 = vsel %vm341, %v317, 0
      %351 = vmatprep.subr.bf16.mxu0 0
      %352 = vmatpush1.bf16.msra.mxu0 0
      %353 = vmatprep.subr.bf16.mxu0 0
      %354 = vmatpush1.bf16.msra.mxu0 0
      %355 = vmatprep.subr.bf16.mxu0 0
      %356 = vmatpush1.bf16.msra.mxu0 0
      %357 = vmatprep.subr.bf16.mxu0 %v346
      %358 = vmatpush1.bf16.msra.mxu0 %v343
      %359 = vmatprep.subr.bf16.mxu0 %v313
      %360 = vmatpush1.bf16.msra.mxu0 %v312
      %361 = vmatprep.subr.bf16.mxu0 %v310
      %362 = vmatpush1.bf16.msra.mxu0 %v309
      %363 = vmatprep.subr.bf16.mxu0 %v307
      %364 = vmatpush1.bf16.msra.mxu0 %v306
      %365 = vmatprep.subr.bf16.mxu0 %v304
      %366 = vmatpush1.bf16.msra.mxu0 %v303
      %367 = vmatprep.subr.bf16.mxu0 0
      %368 = vmatpush2.bf16.msra.mxu0 0
      %369 = vmatprep.subr.bf16.mxu0 0
      %370 = vmatpush2.bf16.msra.mxu0 0
      %371 = vmatprep.subr.bf16.mxu0 0
      %372 = vmatpush2.bf16.msra.mxu0 0
      %373 = vmatprep.subr.bf16.mxu0 0
      %374 = vmatpush2.bf16.msra.mxu0 0
      %375 = vmatprep.subr.bf16.mxu0 0
      %376 = vmatpush2.bf16.msra.mxu0 0
      %377 = vmatprep.subr.bf16.mxu0 0
      %378 = vmatpush2.bf16.msra.mxu0 0
      %379 = vmatprep.subr.bf16.mxu0 0
      %380 = vmatpush2.bf16.msra.mxu0 0
      %381 = vmatprep.subr.bf16.mxu0 0
      %382 = vmatpush2.bf16.msra.mxu0 0
      %383 = vmatprep.mubr.bf16.mxu0 0
      %384 = vmatmul.mubr.bf16.gmra.mxu0 %v339
      %v385 = vpop.f32.mrf.mxu0
      %v386 = vadd.f32 %v325, %v385
      %v387 = vpop.f32.mrf.mxu0
      %v388 = vadd.f32 %v325, %v387
      %v389 = vpop.f32.mrf.mxu0
      %v390 = vadd.f32 %v330, %v389
      %v391 = vpop.f32.mrf.mxu0
      %v392 = vadd.f32 %v330, %v391
      %393 = vdwg.mxu0
      %394 = vmatprep.subr.bf16.mxu0 0
      %395 = vmatpush1.bf16.msra.mxu0 0
      %396 = vmatprep.subr.bf16.mxu0 0
      %397 = vmatpush1.bf16.msra.mxu0 0
      %398 = vmatprep.subr.bf16.mxu0 0
      %399 = vmatpush1.bf16.msra.mxu0 0
      %400 = vmatprep.subr.bf16.mxu0 0
      %401 = vmatpush1.bf16.msra.mxu0 %v349
      %402 = vmatprep.subr.bf16.mxu0 0
      %403 = vmatpush1.bf16.msra.mxu0 %v314
      %404 = vmatprep.subr.bf16.mxu0 0
      %405 = vmatpush1.bf16.msra.mxu0 %v311
      %406 = vmatprep.subr.bf16.mxu0 0
      %407 = vmatpush1.bf16.msra.mxu0 %v308
      %408 = vmatprep.subr.bf16.mxu0 0
      %409 = vmatpush1.bf16.msra.mxu0 %v305
      %410 = vmatprep.subr.bf16.mxu0 0
      %411 = vmatpush2.bf16.msra.mxu0 0
      %412 = vmatprep.subr.bf16.mxu0 0
      %413 = vmatpush2.bf16.msra.mxu0 0
      %414 = vmatprep.subr.bf16.mxu0 0
      %415 = vmatpush2.bf16.msra.mxu0 0
      %416 = vmatprep.subr.bf16.mxu0 0
      %417 = vmatpush2.bf16.msra.mxu0 0
      %418 = vmatprep.subr.bf16.mxu0 0
      %419 = vmatpush2.bf16.msra.mxu0 0
      %420 = vmatprep.subr.bf16.mxu0 0
      %421 = vmatpush2.bf16.msra.mxu0 0
      %422 = vmatprep.subr.bf16.mxu0 0
      %423 = vmatpush2.bf16.msra.mxu0 0
      %424 = vmatprep.subr.bf16.mxu0 0
      %425 = vmatpush2.bf16.msra.mxu0 0
      %426 = vmatprep.mubr.bf16.mxu0 0
      %427 = vmatmul.mubr.bf16.gmra.mxu0 %v339
      %v428 = vpop.f32.mrf.mxu0
      %v429 = vadd.f32 %v325, %v428
      %v430 = vpop.f32.mrf.mxu0
      %v431 = vpop.f32.mrf.mxu0
      %v432 = vadd.f32 %v330, %v431
      %v433 = vpop.f32.mrf.mxu0
      %434 = vdwg.mxu0
      %vm435 = vcmp.ge.f32.partialorder %v386, 0.0
      %vm436 = vcmp.ge.f32.partialorder %v388, 0.0
      %vm437 = vcmp.ge.f32.partialorder %v429, 0.0
      %vm438 = vcmp.ge.f32.partialorder %v390, 0.0
      %vm439 = vcmp.ge.f32.partialorder %v392, 0.0
      %vm440 = vcmp.ge.f32.partialorder %v432, 0.0
      %v441 = vld [vmem:[#allocation2] sm:$0x1]
      %v443 = vlaneseq
      %v444 = vshrl.u32 %v443, 7
      %v445 = vsub.s32 0, %v444
      %v446 = vrot.slane %v441, %v445
      %447 = vset.pattern.permute.xlu0 0
      %448 = vperm.xlu0 %447, %v446
      %v449 = vpop.permute.xlu0 %448
      %v451 = vmul.f32 %v449, %v386
      %v452 = vmul.f32 %v449, %v388
      %v453 = vmul.f32 %v449, %v429
      %v454 = vmul.f32 %v449, %v390
      %v455 = vmul.f32 %v449, %v392
      %v456 = vmul.f32 %v449, %v432
      %v457 = vsel %vm435, %v386, %v451
      %v458 = vsel %vm436, %v388, %v452
      %v459 = vsel %vm437, %v429, %v453
      %v460 = vsel %vm438, %v390, %v454
      %v461 = vsel %vm439, %v392, %v455
      %v462 = vsel %vm440, %v432, %v456
      %463 = vst [vmem:[%s199] sm:$0xff] %v457
      %464 = vst [vmem:[%s199 + $0x8] sm:$0xff] %v458
      %vm465 = vcmask 261120
      %466 = vst.msk [vmem:[%s199 + $0x10] sm:$0xff] %vm465, %v459
      %467 = vst [vmem:[%s199 + $0x18] sm:$0xff] %v460
      %468 = vst [vmem:[%s199 + $0x20] sm:$0xff] %v461
      %469 = vst.msk [vmem:[%s199 + $0x28] sm:$0xff] %vm465, %v462
      %p470 = scmp.lt.s32.totalorder %s17, 1
      %s471 = scalar_select %p470, %s17, 1
      %s472 = smul.addr %s471, 6
      %s473 = smul.addr %s472, 8
      %s474 = scalar_lea.vmem %s4, %s473
      // Predicated region
      $region37: #{deconv_block_forward.1} parent=35 // pred_check
        %p475 = pneg %p124
      $region38: #{deconv_block_forward.1} parent=35 // pred_check_branch
        %477 = sbr.rel (%p475) target = $region40
      $region39: #{deconv_block_forward.1} parent=35 // pred_region
        _
      $region40: #{deconv_block_forward.1} parent=35 // pred_fallthru
        _
    $region36: #{deconv_block_forward.1} parent=5 // pred_fallthru
      _
    %p478 = scmp.le.s32.totalorder 2, %s12
    // Predicated region
    $region41: #{deconv_block_forward.1} parent=5 // pred_check
      %p479 = pneg %p478
    $region42: #{deconv_block_forward.1} parent=5 // pred_check_branch
      %481 = sbr.rel (%p479) target = $region44
    $region43: #{deconv_block_forward.1} parent=5 // pred_region
      %s482 = ssub.s32 %s12, 2
      // Predicated region
      $region45: #{deconv_block_forward.1} parent=43 // pred_check
        %p483 = pneg %p130
      $region46: #{deconv_block_forward.1} parent=43 // pred_check_branch
        %485 = sbr.rel (%p483) target = $region48
      $region47: #{deconv_block_forward.1} parent=43 // pred_region
        %p486 = scmp.lt.s32.totalorder %s18, 1
        %s487 = scalar_select %p486, %s18, 1
        %s488 = smul.addr %s487, 6
        %s489 = smul.addr %s488, 8
        %s490 = scalar_lea.vmem %s4, %s489
      $region48: #{deconv_block_forward.1} parent=43 // pred_fallthru
        _
    $region44: #{deconv_block_forward.1} parent=5 // pred_fallthru
      _
  $region6: #{deconv_block_forward.1} parent=0 // loop_footer
    %s16 = sadd.s32 1, %s12
  $region7: #{deconv_block_forward.1} parent=0 // loop_footer_branch
    %11 = sbr.rel target = $region3
  $region8: #{deconv_block_forward.1} parent=0 // loop_exit
    _

</llo_original>
